<compile_context>
chip_gen: v5e
topology: v5e:2x2
jax: 0.10.0
libtpu: 0.0.40
codegen_flags: <defaults>
</compile_context>

<pallas_src>
import functools

import jax
import jax.numpy as jnp
from jax.experimental import pallas as pl
from jax.experimental.pallas import tpu as pltpu


def _round_up(n: int, m: int) -> int:
    return ((n + m - 1) // m) * m


def _cont_emb_kernel(x_ref, wb_ref, o_ref):
    # x_ref: (tm, 1) input dtype, wb_ref: (2, H) f32, o_ref: (tm, H) out dtype.
    w = wb_ref[0:1, :]                       # (1, H)
    b = wb_ref[1:2, :]                       # (1, H)
    # f32 math (promotion via the f32 wb block), cast only at the store.
    o_ref[...] = (x_ref[...] * w + b).astype(o_ref.dtype)


@functools.partial(jax.jit, static_argnames=("tm", "out_dtype"))
def continuous_embedding(x, weight, bias, *, tm=8192, out_dtype=None):
    """x: [B, K, D], weight/bias: [H]  ->  [B, K, D, H].

    out_dtype=jnp.bfloat16 halves the (dominant) HBM write traffic; default
    keeps the input dtype to match the PyTorch module exactly.
    """
    B, K, D = x.shape
    H = weight.shape[0]
    N = B * K * D
    out_dtype = x.dtype if out_dtype is None else out_dtype

    # Row tile: as large as allowed (lane-dense vst, amortized per-step cost),
    # but for small N shrink so the grid has >= 2 roughly-even steps (keeps
    # both v7x TensorCores busy).  Must be a multiple of 8 (sublane constraint
    # on the (tm, 1) x block and the (tm, H) output block).
    tm_eff = max(8, min(tm, _round_up(-(-N // 2), 8)))
    grid = (pl.cdiv(N, tm_eff),)             # ragged last block -> masked writes

    # Flatten x to rows (free reshape).  No padding needed.
    x2 = x.reshape(N, 1)

    # Fuse weight and bias into one resident (2, H) f32 block.
    wb = jnp.stack([weight, bias], axis=0).astype(jnp.float32)

    # Explicit VMEM budget: 2 x output block + 2 x lane-padded x block + wb.
    # (A (tm, 1) f32 block occupies tm * 128 lanes * 4 B in VMEM.)
    # TODO(synk): for H < 128, fold g rows into lanes (out viewed as
    # (N//g, g*H)) to avoid lane-masked stores; H=128 here is already dense.
    out_itemsize = jnp.dtype(out_dtype).itemsize
    x_itemsize = max(jnp.dtype(x.dtype).itemsize, 4)
    h_lanes = max(H, 128)
    vmem_need = (2 * tm_eff * 128 * x_itemsize          # x double buffer (lane padded)
                 + 2 * tm_eff * h_lanes * out_itemsize  # output double buffer
                 + 2 * 2 * h_lanes * 4)                 # wb
    vmem_limit = int(min(max(2 * vmem_need, 16 << 20), 48 << 20))

    cost = pl.CostEstimate(
        flops=2 * N * H,
        transcendentals=0,
        bytes_accessed=N * jnp.dtype(x.dtype).itemsize
        + 2 * H * 4
        + N * H * out_itemsize,
    )

    out = pl.pallas_call(
        _cont_emb_kernel,
        out_shape=jax.ShapeDtypeStruct((N, H), out_dtype),
        grid_spec=pltpu.PrefetchScalarGridSpec(
            num_scalar_prefetch=0,
            grid=grid,
            in_specs=[
                pl.BlockSpec((tm_eff, 1), lambda i: (i, 0)),
                pl.BlockSpec((2, H), lambda i: (0, 0)),   # resident, DMA'd once
            ],
            out_specs=pl.BlockSpec((tm_eff, H), lambda i: (i, 0)),
        ),
        compiler_params=pltpu.CompilerParams(
            dimension_semantics=("parallel",),
            vmem_limit_bytes=vmem_limit,
        ),
        cost_estimate=cost,
    )(x2, wb)

    return out.reshape(B, K, D, H)


if __name__ == "__main__":
    key = jax.random.PRNGKey(0)
    kx, kw, kx2 = jax.random.split(key, 3)

    # ---- case 1: N divisible by the tile (even 2-step grid) ----
    B, K, D, H = 2, 8, 16, 128   # N = 256 rows, hidden = 128

    x = jax.random.normal(kx, (B, K, D), dtype=jnp.float32)

    # Deterministic param init mirroring the PyTorch module:
    #   weight: xavier_normal_ on (1,1,1,H) -> std = sqrt(2/(H+H)) = 1/sqrt(H)
    #   bias:   zeros
    std = (2.0 / (H + H)) ** 0.5
    weight = jax.random.normal(kw, (H,), dtype=jnp.float32) * std
    bias = jnp.zeros((H,), dtype=jnp.float32)

    out = jax.block_until_ready(continuous_embedding(x, weight, bias))
    ref = x[..., None] * weight[None, None, None, :] + bias[None, None, None, :]
    assert out.shape == (B, K, D, H)
    assert out.dtype == x.dtype
    assert jnp.allclose(out, ref, atol=1e-6, rtol=1e-6)

    # ---- case 2: ragged N (exercises the masked last block; no pad/slice) ----
    B2, K2, D2 = 3, 5, 7          # N = 105
    x_b = jax.random.normal(kx2, (B2, K2, D2), dtype=jnp.float32)
    out_b = jax.block_until_ready(continuous_embedding(x_b, weight, bias))
    ref_b = x_b[..., None] * weight[None, None, None, :] + bias[None, None, None, :]
    assert out_b.shape == (B2, K2, D2, H)
    assert jnp.allclose(out_b, ref_b, atol=1e-6, rtol=1e-6)

    # ---- case 3: bf16 output (the ~2x HBM-write-bandwidth knob) ----
    out_bf = jax.block_until_ready(
        continuous_embedding(x, weight, bias, out_dtype=jnp.bfloat16))
    assert out_bf.dtype == jnp.bfloat16
    assert jnp.allclose(out_bf.astype(jnp.float32), ref, atol=1e-2, rtol=2e-2)

    print("KERNEL_OK")
</pallas_src>

<mosaic_0001>
module attributes {stable_mosaic.version = 11 : i64} {
  func.func @_cont_emb_kernel(%arg0: i32, %arg1: memref<128x1xf32, #tpu.memory_space<vmem>>, %arg2: memref<2x128xf32, #tpu.memory_space<vmem>>, %arg3: memref<128x128xf32, #tpu.memory_space<vmem>>) attributes {dimension_semantics = [#tpu.dimension_semantics<parallel>], iteration_bounds = array<i64: 2>, scalar_prefetch = 0 : i64, scratch_operands = 0 : i64, tpu.core_type = #tpu.core_type<tc>, window_params = [{transform_indices = @transform_0, window_bounds = array<i64: 128, 1>}, {pipeline_mode = #tpu.pipeline_mode<synchronous>, transform_indices = @transform_1, window_bounds = array<i64: 2, 128>}, {transform_indices = @transform_2, window_bounds = array<i64: 128, 128>}]} {
    %c0 = arith.constant 0 : index
    %c0_0 = arith.constant 0 : index
    %0 = vector.load %arg2[%c0, %c0_0] : memref<2x128xf32, #tpu.memory_space<vmem>>, vector<1x128xf32>
    %c1 = arith.constant 1 : index
    %c0_1 = arith.constant 0 : index
    %1 = vector.load %arg2[%c1, %c0_1] : memref<2x128xf32, #tpu.memory_space<vmem>>, vector<1x128xf32>
    %c0_2 = arith.constant 0 : index
    %c0_3 = arith.constant 0 : index
    %2 = vector.load %arg1[%c0_2, %c0_3] : memref<128x1xf32, #tpu.memory_space<vmem>>, vector<128x1xf32>
    %3 = vector.broadcast %2 : vector<128x1xf32> to vector<128x128xf32>
    %4 = vector.broadcast %0 : vector<1x128xf32> to vector<128x128xf32>
    %5 = arith.mulf %3, %4 : vector<128x128xf32>
    %6 = vector.broadcast %1 : vector<1x128xf32> to vector<128x128xf32>
    %7 = arith.addf %5, %6 : vector<128x128xf32>
    %c0_4 = arith.constant 0 : index
    %c0_5 = arith.constant 0 : index
    %8 = vector.load %arg3[%c0_4, %c0_5] : memref<128x128xf32, #tpu.memory_space<vmem>>, vector<128x128xf32>
    tpu.vector_store %arg3[%c0_4, %c0_5], %7 {strides = array<i32>} : memref<128x128xf32, #tpu.memory_space<vmem>>, vector<128x128xf32>,
    return
  }
  func.func @transform_0(%arg0: i32) -> (i32, i32) {
    %c0_i32 = arith.constant 0 : i32
    %c0_i32_0 = arith.constant 0 : i32
    return %arg0, %c0_i32 : i32, i32
  }
  func.func @transform_1(%arg0: i32) -> (i32, i32) {
    %c0_i32 = arith.constant 0 : i32
    %c0_i32_0 = arith.constant 0 : i32
    %c0_i32_1 = arith.constant 0 : i32
    return %c0_i32, %c0_i32_0 : i32, i32
  }
  func.func @transform_2(%arg0: i32) -> (i32, i32) {
    %c0_i32 = arith.constant 0 : i32
    %c0_i32_0 = arith.constant 0 : i32
    return %arg0, %c0_i32 : i32, i32
  }
}

</mosaic_0001>

<llo_original>
// kernel: continuous_embedding.1
$region0: #{continuous_embedding.1}
  #allocation0 [shape = 'u32[]', space=smem, size = 0x4, offset = 0x4, fixed_abs, tag = 'smem constant byte address 0x4 - core index']
  #allocation1 [shape = 'u32[72,128]{1,0:T(1,128)}', space=vmem, size = 0x9000, scoped, tag = 'internal scratch']
  %s0 = inlined_call_operand.vmem [shape: f32[256,1], index: 0, kind: input, shape index: {}]
  %s1 = inlined_call_operand.vmem [shape: f32[2,128], index: 1, kind: input, shape index: {}]
  %s2 = inlined_call_operand.hbm [shape: f32[256,128], index: 2, kind: output, shape index: {}]
  %s3 = sld [smem:[#allocation0]]
  $region41: #{continuous_embedding.1} parent=0
    _
  %s5 = ssub.s32 1, %s3
  %s6 = scalar_select 0, %s5, %s3
  $region1: #{continuous_embedding.1} parent=0
    #allocation2 [shape = 'u8[131072]{0}', space=vmem, size = 0x20000, scoped, tag = 'output window, operand 0']
    #allocation3 [shape = 's32[2]{0}', space=sflag, size = 0x8, scoped, tag = 'scoped memory for continuous_embedding.1']
    %7 = vsyncpa [#allocation3], 0
    %s8 = scalar_lea.sflag [#allocation3], 1
    %9 = vsyncpa %s8, 0
    loop: start=0, step=1, limit=4
    $region2: #{continuous_embedding.1} parent=1 // loop_pre_header
      _
    $region3: #{continuous_embedding.1} parent=1 // loop_header
      %s11 = sphi 0, %s15
      %p12 = scmp.ge.s32.totalorder %s11, 4
      %s21 = sphi 0, %s23
      %s24 = sphi 0, %s21
      %s25 = sphi 0, %s24
      %s41 = sphi 0, %s25
      %s45 = sphi 0, %s45
      %s47 = sphi 0, %s45
      %s48 = sphi 0, %s47
      %s62 = sphi 0, %s48
      %s68 = sphi 0, %s70
      %s71 = sphi 0, %s68
      %s72 = sphi 0, %s71
      %s88 = sphi 0, %s72
    $region4: #{continuous_embedding.1} parent=1 // loop_header_branch
      %14 = sbr.rel (%p12) target = $region8
    $region5: #{continuous_embedding.1} parent=1 // loop_body
      %s16 = ssub.s32 %s11, 1
      %s17 = ssub.s32 %s11, 2
      %s18 = sadd.s32 %s11, 1
      %s19 = ssub.s32 %s11, %s18
      %p20 = scmp.eq.s32.totalorder %s19, 0
      %s22 = sadd.s32 %s21, 1
      %s23 = scalar_select %p20, %s21, %s22
      %p26 = pneg %p20
      %p27 = scmp.eq.s32.totalorder %s11, 1
      %p28 = por %p26, %p27
      %p29 = scmp.ne.s32.totalorder %s21, %s24
      %p30 = scmp.eq.s32.totalorder %s11, 0
      %p31 = por %p29, %p30
      %p32 = scmp.ne.s32.totalorder %s21, %s24
      %p33 = scmp.eq.s32.totalorder %s16, 1
      %p34 = por %p32, %p33
      %p35 = scmp.ne.s32.totalorder %s24, %s25
      %p36 = scmp.eq.s32.totalorder %s16, 0
      %p37 = por %p35, %p36
      %p38 = scmp.ne.s32.totalorder %s24, %s25
      %p39 = scmp.eq.s32.totalorder %s17, 1
      %p40 = por %p38, %p39
      %p42 = scmp.ne.s32.totalorder %s25, %s41
      %p43 = scmp.eq.s32.totalorder %s17, 0
      %p44 = por %p42, %p43
      %s46 = sadd.s32 %s45, 1
      %p49 = scmp.eq.s32.totalorder %s11, 1
      %p50 = scmp.ne.s32.totalorder %s45, %s47
      %p51 = scmp.eq.s32.totalorder %s11, 0
      %p52 = por %p50, %p51
      %p53 = scmp.ne.s32.totalorder %s45, %s47
      %p54 = scmp.eq.s32.totalorder %s16, 1
      %p55 = por %p53, %p54
      %p56 = scmp.ne.s32.totalorder %s47, %s48
      %p57 = scmp.eq.s32.totalorder %s16, 0
      %p58 = por %p56, %p57
      %p59 = scmp.ne.s32.totalorder %s47, %s48
      %p60 = scmp.eq.s32.totalorder %s17, 1
      %p61 = por %p59, %p60
      %p63 = scmp.ne.s32.totalorder %s48, %s62
      %p64 = scmp.eq.s32.totalorder %s17, 0
      %p65 = por %p63, %p64
      %s66 = ssub.s32 %s11, %s18
      %p67 = scmp.eq.s32.totalorder %s66, 0
      %s69 = sadd.s32 %s68, 1
      %s70 = scalar_select %p67, %s68, %s69
      %p73 = pneg %p67
      %p74 = scmp.eq.s32.totalorder %s11, 1
      %p75 = por %p73, %p74
      %p76 = scmp.ne.s32.totalorder %s68, %s71
      %p77 = scmp.eq.s32.totalorder %s11, 0
      %p78 = por %p76, %p77
      %p79 = scmp.ne.s32.totalorder %s68, %s71
      %p80 = scmp.eq.s32.totalorder %s16, 1
      %p81 = por %p79, %p80
      %p82 = scmp.ne.s32.totalorder %s71, %s72
      %p83 = scmp.eq.s32.totalorder %s16, 0
      %p84 = por %p82, %p83
      %p85 = scmp.ne.s32.totalorder %s71, %s72
      %p86 = scmp.eq.s32.totalorder %s17, 1
      %p87 = por %p85, %p86
      %p89 = scmp.ne.s32.totalorder %s72, %s88
      %p90 = scmp.eq.s32.totalorder %s17, 0
      %p91 = por %p89, %p90
      %p92 = scmp.le.s32.totalorder 1, %s11
      %p93 = scmp.lt.s32.totalorder %s11, 3
      %p94 = pnand %p92, %p93
      %p95 = pneg %p94
      // Predicated region
      $region9: #{continuous_embedding.1} parent=5 // pred_check
        _
      $region10: #{continuous_embedding.1} parent=5 // pred_check_branch
        %97 = sbr.rel (%p94) target = $region12
      $region11: #{continuous_embedding.1} parent=5 // pred_region
        %s98 = ssub.s32 %s11, 1
        // Predicated region
        $region13: #{continuous_embedding.1} parent=11 // pred_check
          %p99 = pneg %p58
        $region14: #{continuous_embedding.1} parent=11 // pred_check_branch
          %101 = sbr.rel (%p99) target = $region16
        $region15: #{continuous_embedding.1} parent=11 // pred_region
          _
        $region16: #{continuous_embedding.1} parent=11 // pred_fallthru
          _
      $region12: #{continuous_embedding.1} parent=5 // pred_fallthru
        _
      %p102 = scmp.lt.s32.totalorder %s11, 2
      // Predicated region
      $region17: #{continuous_embedding.1} parent=5 // pred_check
        %p103 = pneg %p102
      $region18: #{continuous_embedding.1} parent=5 // pred_check_branch
        %105 = sbr.rel (%p103) target = $region20
      $region19: #{continuous_embedding.1} parent=5 // pred_region
        // Predicated region
        $region21: #{continuous_embedding.1} parent=19 // pred_check
          %p106 = pneg %p31
        $region22: #{continuous_embedding.1} parent=19 // pred_check_branch
          %108 = sbr.rel (%p106) target = $region24
        $region23: #{continuous_embedding.1} parent=19 // pred_region
          %s109 = smul.u32 16, %s11
          %p110 = scmp.lt.s32.totalorder %s109, 31
          %s111 = scalar_select %p110, %s109, 31
          %s112 = smul.addr %s111, 8
          %s113 = scalar_lea.vmem %s0, %s112
          %s114 = smul.u32 16, %s11
        $region24: #{continuous_embedding.1} parent=19 // pred_fallthru
          _
      $region20: #{continuous_embedding.1} parent=5 // pred_fallthru
        _
      %p115 = scmp.le.s32.totalorder 1, %s11
      %p116 = scmp.lt.s32.totalorder %s11, 3
      %p117 = pnand %p115, %p116
      %p118 = pneg %p117
      // Predicated region
      $region25: #{continuous_embedding.1} parent=5 // pred_check
        _
      $region26: #{continuous_embedding.1} parent=5 // pred_check_branch
        %120 = sbr.rel (%p117) target = $region28
      $region27: #{continuous_embedding.1} parent=5 // pred_region
        %s121 = ssub.s32 %s11, 1
        %s122 = smul.u32 16, %s16
        %p123 = scmp.lt.s32.totalorder %s122, 31
        %s124 = scalar_select %p123, %s122, 31
        %s125 = smul.addr %s124, 8
        %s126 = scalar_lea.vmem %s0, %s125
        %p127 = pneg %p37
        %p128 = pneg %p34
        %p129 = pneg %p58
        %p130 = pneg %p55
        %p131 = pneg %p84
        %p132 = pneg %p81
        %s133 = sand.u32 %s71, 1
        %s134 = scalar_lea.sflag [#allocation3], %s133
        %s135 = sand.u32 %s71, 1
        %s136 = smul.addr %s135, 128
        %s137 = scalar_lea.vmem [#allocation2], %s136
        %s138 = smul.u32 16, %s16
        %p139 = scmp.lt.s32.totalorder %s138, 31
        %s140 = scalar_select %p139, %s138, 31
        %s141 = smul.addr %s140, 8
        %s142 = scalar_lea.vmem %s0, %s141
        %s143 = smul.u32 16, %s16
        %s144 = smul.u32 16, %s16
        %v145 = vld [vmem:[%s1] sm:$0x1]
        %v146 = vld [vmem:[%s1 + $0x1] sm:$0x1]
        %v147 = vld [vmem:[%s142] sm:$0xff]
        %v148 = vld [vmem:[%s142 + $0x8] sm:$0xff]
        %v149 = vld [vmem:[%s142 + $0x10] sm:$0xff]
        %v150 = vld [vmem:[%s142 + $0x18] sm:$0xff]
        %v151 = vld [vmem:[%s142 + $0x20] sm:$0xff]
        %v152 = vld [vmem:[%s142 + $0x28] sm:$0xff]
        %v153 = vld [vmem:[%s142 + $0x30] sm:$0xff]
        %v154 = vld [vmem:[%s142 + $0x38] sm:$0xff]
        %v155 = vld [vmem:[%s142 + $0x40] sm:$0xff]
        %v156 = vld [vmem:[%s142 + $0x48] sm:$0xff]
        %v157 = vld [vmem:[%s142 + $0x50] sm:$0xff]
        %v158 = vld [vmem:[%s142 + $0x58] sm:$0xff]
        %v159 = vld [vmem:[%s142 + $0x60] sm:$0xff]
        %v160 = vld [vmem:[%s142 + $0x68] sm:$0xff]
        %v161 = vld [vmem:[%s142 + $0x70] sm:$0xff]
        %v162 = vld [vmem:[%s142 + $0x78] sm:$0xff]
        %164 = vset.pattern.permute.xlu0 0
        %165 = vperm.xlu0 %164, %v147
        %v166 = vpop.permute.xlu0 %165
        %169 = vset.pattern.permute.xlu0 0
        %170 = vperm.xlu0 %169, %v148
        %v171 = vpop.permute.xlu0 %170
        %174 = vset.pattern.permute.xlu0 0
        %175 = vperm.xlu0 %174, %v149
        %v176 = vpop.permute.xlu0 %175
        %179 = vset.pattern.permute.xlu0 0
        %180 = vperm.xlu0 %179, %v150
        %v181 = vpop.permute.xlu0 %180
        %184 = vset.pattern.permute.xlu0 0
        %185 = vperm.xlu0 %184, %v151
        %v186 = vpop.permute.xlu0 %185
        %189 = vset.pattern.permute.xlu0 0
        %190 = vperm.xlu0 %189, %v152
        %v191 = vpop.permute.xlu0 %190
        %194 = vset.pattern.permute.xlu0 0
        %195 = vperm.xlu0 %194, %v153
        %v196 = vpop.permute.xlu0 %195
        %199 = vset.pattern.permute.xlu0 0
        %200 = vperm.xlu0 %199, %v154
        %v201 = vpop.permute.xlu0 %200
        %204 = vset.pattern.permute.xlu0 0
        %205 = vperm.xlu0 %204, %v155
        %v206 = vpop.permute.xlu0 %205
        %209 = vset.pattern.permute.xlu0 0
        %210 = vperm.xlu0 %209, %v156
        %v211 = vpop.permute.xlu0 %210
        %214 = vset.pattern.permute.xlu0 0
        %215 = vperm.xlu0 %214, %v157
        %v216 = vpop.permute.xlu0 %215
        %219 = vset.pattern.permute.xlu0 0
        %220 = vperm.xlu0 %219, %v158
        %v221 = vpop.permute.xlu0 %220
        %224 = vset.pattern.permute.xlu0 0
        %225 = vperm.xlu0 %224, %v159
        %v226 = vpop.permute.xlu0 %225
        %229 = vset.pattern.permute.xlu0 0
        %230 = vperm.xlu0 %229, %v160
        %v231 = vpop.permute.xlu0 %230
        %234 = vset.pattern.permute.xlu0 0
        %235 = vperm.xlu0 %234, %v161
        %v236 = vpop.permute.xlu0 %235
        %239 = vset.pattern.permute.xlu0 0
        %240 = vperm.xlu0 %239, %v162
        %v241 = vpop.permute.xlu0 %240
        %v243 = vperm.slane %v145, 0
        %v244 = vmul.f32 %v166, %v243
        %v245 = vmul.f32 %v171, %v243
        %v246 = vmul.f32 %v176, %v243
        %v247 = vmul.f32 %v181, %v243
        %v248 = vmul.f32 %v186, %v243
        %v249 = vmul.f32 %v191, %v243
        %v250 = vmul.f32 %v196, %v243
        %v251 = vmul.f32 %v201, %v243
        %v252 = vmul.f32 %v206, %v243
        %v253 = vmul.f32 %v211, %v243
        %v254 = vmul.f32 %v216, %v243
        %v255 = vmul.f32 %v221, %v243
        %v256 = vmul.f32 %v226, %v243
        %v257 = vmul.f32 %v231, %v243
        %v258 = vmul.f32 %v236, %v243
        %v259 = vmul.f32 %v241, %v243
        %v260 = vperm.slane %v146, 0
        %v261 = vadd.f32 %v244, %v260
        %v262 = vadd.f32 %v245, %v260
        %v263 = vadd.f32 %v246, %v260
        %v264 = vadd.f32 %v247, %v260
        %v265 = vadd.f32 %v248, %v260
        %v266 = vadd.f32 %v249, %v260
        %v267 = vadd.f32 %v250, %v260
        %v268 = vadd.f32 %v251, %v260
        %v269 = vadd.f32 %v252, %v260
        %v270 = vadd.f32 %v253, %v260
        %v271 = vadd.f32 %v254, %v260
        %v272 = vadd.f32 %v255, %v260
        %v273 = vadd.f32 %v256, %v260
        %v274 = vadd.f32 %v257, %v260
        %v275 = vadd.f32 %v258, %v260
        %v276 = vadd.f32 %v259, %v260
        %277 = vst [vmem:[%s137] sm:$0xff] %v261
        %278 = vst [vmem:[%s137 + $0x8] sm:$0xff] %v262
        %279 = vst [vmem:[%s137 + $0x10] sm:$0xff] %v263
        %280 = vst [vmem:[%s137 + $0x18] sm:$0xff] %v264
        %281 = vst [vmem:[%s137 + $0x20] sm:$0xff] %v265
        %282 = vst [vmem:[%s137 + $0x28] sm:$0xff] %v266
        %283 = vst [vmem:[%s137 + $0x30] sm:$0xff] %v267
        %284 = vst [vmem:[%s137 + $0x38] sm:$0xff] %v268
        %285 = vst [vmem:[%s137 + $0x40] sm:$0xff] %v269
        %286 = vst [vmem:[%s137 + $0x48] sm:$0xff] %v270
        %287 = vst [vmem:[%s137 + $0x50] sm:$0xff] %v271
        %288 = vst [vmem:[%s137 + $0x58] sm:$0xff] %v272
        %289 = vst [vmem:[%s137 + $0x60] sm:$0xff] %v273
        %290 = vst [vmem:[%s137 + $0x68] sm:$0xff] %v274
        %291 = vst [vmem:[%s137 + $0x70] sm:$0xff] %v275
        %292 = vst [vmem:[%s137 + $0x78] sm:$0xff] %v276
        %s293 = sand.u32 %s71, 1
        %s294 = scalar_lea.sflag [#allocation3], %s293
        %s295 = sand.u32 %s71, 1
        %s296 = smul.addr %s295, 128
        %s297 = scalar_lea.vmem [#allocation2], %s296
        // Predicated region
        $region29: #{continuous_embedding.1} parent=27 // pred_check
          %p298 = pneg %p81
        $region30: #{continuous_embedding.1} parent=27 // pred_check_branch
          %300 = sbr.rel (%p298) target = $region32
        $region31: #{continuous_embedding.1} parent=27 // pred_region
          %s301 = smul.u32 16, %s16
          %303 = vsyncadd %s294, 0
          %s304 = smul.addr %s301, 8
          %s305 = scalar_lea.hbm %s2, %s304
          %s306 = sshll.u32 %s297, 4
          %s307 = int_to_ptr.vmem [resolvable:$true] %s306
          %s308 = sshll.u32 %s305, 4
          %s309 = int_to_ptr.hbm [resolvable:$true] %s308
          %314 = dma.vmem_to_hbm [thread:$0]  %s307, 2048, %s309, %s294, 128, 128, 8
        $region32: #{continuous_embedding.1} parent=27 // pred_fallthru
          _
      $region28: #{continuous_embedding.1} parent=5 // pred_fallthru
        _
      %p315 = scmp.le.s32.totalorder 2, %s11
      // Predicated region
      $region33: #{continuous_embedding.1} parent=5 // pred_check
        %p316 = pneg %p315
      $region34: #{continuous_embedding.1} parent=5 // pred_check_branch
        %318 = sbr.rel (%p316) target = $region36
      $region35: #{continuous_embedding.1} parent=5 // pred_region
        %s319 = ssub.s32 %s11, 2
        // Predicated region
        $region37: #{continuous_embedding.1} parent=35 // pred_check
          %p320 = pneg %p87
        $region38: #{continuous_embedding.1} parent=35 // pred_check_branch
          %322 = sbr.rel (%p320) target = $region40
        $region39: #{continuous_embedding.1} parent=35 // pred_region
          %s323 = sand.u32 %s72, 1
          %s324 = scalar_lea.sflag [#allocation3], %s323
          %s325 = sand.u32 %s72, 1
          %s326 = smul.addr %s325, 128
          %s327 = scalar_lea.vmem [#allocation2], %s326
          %329 = dma.done %s324, 2048
        $region40: #{continuous_embedding.1} parent=35 // pred_fallthru
          _
      $region36: #{continuous_embedding.1} parent=5 // pred_fallthru
        _
    $region6: #{continuous_embedding.1} parent=1 // loop_footer
      %s15 = sadd.s32 1, %s11
    $region7: #{continuous_embedding.1} parent=1 // loop_footer_branch
      %10 = sbr.rel target = $region3
    $region8: #{continuous_embedding.1} parent=1 // loop_exit
      _
    %330 = vsyncpa [#allocation3], 1
    %s331 = scalar_lea.sflag [#allocation3], 1
    %332 = vsyncpa %s331, 1

</llo_original>
